<compile_context>
chip_gen: v7x
topology: tpu7x:2x2x1
jax: 0.10.0
libtpu: 0.0.40
codegen_flags: <defaults>
</compile_context>

<pallas_src>
import jax
import jax.numpy as jnp
from jax.experimental import pallas as pl
from jax.experimental.pallas import tpu as pltpu

SLAB_WIDTH = 1024            # lane-dense slab: 8 vregs wide per row
SUBLANES = 8                 # f32 sublane granularity
ALIGN = SLAB_WIDTH * SUBLANES  # 8192 elements: pad / reshape granularity
MAX_TILE_ROWS = 1024         # (1024, 1024) f32 = 4 MiB per buffer
MIN_BLOCKS = 4               # keep >=2 blocks per v7x TensorCore
SMALL_N = 1 << 17            # below this, plain JAX beats the Pallas dispatch


def rede_kernel(ac_ref, x_ref, o_ref):
    # ac_ref: (2,) f32 in SMEM -> [a, c] (folded scale / shift)
    # x_ref / o_ref: (tile_rows, 1024) f32 in VMEM
    o_ref[...] = x_ref[...] * ac_ref[0] + ac_ref[1]   # one VPU FMA per vreg


def _round_up(v, m):
    return ((v + m - 1) // m) * m


def rede_forward(x, w1, b1, w2, b2, *, min_pallas_elems=SMALL_N):
    """x: (..., 1) -> (..., 1); w1: (10, 1); b1: (10,); w2: (1, 10); b2: (1,)."""
    # Fold the two affine layers (valid: no activation in between).
    a = (w2 @ w1).reshape(())        # scalar
    c = (w2 @ b1 + b2).reshape(())   # scalar

    orig_shape = x.shape
    xf = x.astype(jnp.float32)
    n = xf.size

    # Small-N fast path: dispatch + reshape HLOs dwarf the actual work.
    if n < min_pallas_elems:
        return xf * a + c

    ac = jnp.stack([a, c]).astype(jnp.float32)   # (2,) -> SMEM

    flat = xf.reshape(-1)
    aligned = (n % ALIGN) == 0
    padded = n if aligned else _round_up(n, ALIGN)
    if not aligned:
        flat = jnp.pad(flat, (0, padded - n))    # ragged case only (<= 32 KiB)
    rows = padded // SLAB_WIDTH                  # multiple of SUBLANES
    slab = flat.reshape(rows, SLAB_WIDTH)        # contiguous reshape: free

    # ~4 MiB blocks, but always aim for >= MIN_BLOCKS grid steps so the
    # "parallel" axis can shard across both v7x TensorCores.
    tile_rows = max(SUBLANES,
                    min(MAX_TILE_ROWS,
                        _round_up(pl.cdiv(rows, MIN_BLOCKS), SUBLANES)))
    grid = (pl.cdiv(rows, tile_rows),)           # last block may be partial

    out = pl.pallas_call(
        rede_kernel,
        out_shape=jax.ShapeDtypeStruct((rows, SLAB_WIDTH), jnp.float32),
        grid=grid,
        in_specs=[
            pl.BlockSpec(memory_space=pltpu.MemorySpace.SMEM),         # [a, c]
            pl.BlockSpec((tile_rows, SLAB_WIDTH), lambda i: (i, 0)),   # x slab
        ],
        out_specs=pl.BlockSpec((tile_rows, SLAB_WIDTH), lambda i: (i, 0)),
        compiler_params=pltpu.CompilerParams(
            dimension_semantics=("parallel",),
        ),
    )(ac, slab)

    if aligned:
        return out.reshape(orig_shape)           # no output slice in common case
    return out.reshape(-1)[:n].reshape(orig_shape)


def init_params(key):
    # Mimics nn.Linear's uniform(-1/sqrt(fan_in), 1/sqrt(fan_in)) init.
    k1, k2, k3, k4 = jax.random.split(key, 4)
    bound1 = 1.0 / jnp.sqrt(1.0)    # fan_in = 1
    bound2 = 1.0 / jnp.sqrt(10.0)   # fan_in = 10
    w1 = jax.random.uniform(k1, (10, 1), jnp.float32, -bound1, bound1)
    b1 = jax.random.uniform(k2, (10,), jnp.float32, -bound1, bound1)
    w2 = jax.random.uniform(k3, (1, 10), jnp.float32, -bound2, bound2)
    b2 = jax.random.uniform(k4, (1,), jnp.float32, -bound2, bound2)
    return w1, b1, w2, b2


if __name__ == "__main__":
    key = jax.random.PRNGKey(0)
    kx1, kx2, kx3, kp = jax.random.split(key, 4)
    w1, b1, w2, b2 = init_params(kp)

    def ref(xv):
        return (xv @ w1.T + b1) @ w2.T + b2

    # 1) Spec-sized small batch: plain-JAX fast path.
    x_small = jax.random.normal(kx1, (8, 1), jnp.float32)
    out_small = jax.block_until_ready(rede_forward(x_small, w1, b1, w2, b2))
    assert out_small.shape == (8, 1)
    assert jnp.allclose(out_small, ref(x_small), atol=1e-5, rtol=1e-5)

    # 2) Aligned batch: Pallas path, no pad / no slice, multi-block grid.
    x_big = jax.random.normal(kx2, (131072, 1), jnp.float32)
    out_big = jax.block_until_ready(
        rede_forward(x_big, w1, b1, w2, b2, min_pallas_elems=0))
    assert out_big.shape == (131072, 1)
    assert jnp.allclose(out_big, ref(x_big), atol=1e-5, rtol=1e-5)

    # 3) Ragged batch: Pallas path via jnp.pad + output slice + partial block.
    x_rag = jax.random.normal(kx3, (5000, 1), jnp.float32)
    out_rag = jax.block_until_ready(
        rede_forward(x_rag, w1, b1, w2, b2, min_pallas_elems=0))
    assert out_rag.shape == (5000, 1)
    assert jnp.allclose(out_rag, ref(x_rag), atol=1e-5, rtol=1e-5)

    print("KERNEL_OK")
</pallas_src>

<mosaic_0001>
module attributes {stable_mosaic.version = 11 : i64} {
  func.func @rede_kernel(%arg0: i32, %arg1: memref<2xf32, #tpu.memory_space<smem>>, %arg2: memref<32x1024xf32, #tpu.memory_space<vmem>>, %arg3: memref<32x1024xf32, #tpu.memory_space<vmem>>) attributes {dimension_semantics = [#tpu.dimension_semantics<parallel>], iteration_bounds = array<i64: 4>, scalar_prefetch = 0 : i64, scratch_operands = 0 : i64, tpu.core_type = #tpu.core_type<tc>, window_params = [{transform_indices = @transform_0, window_bounds = array<i64: 2>}, {transform_indices = @transform_1, window_bounds = array<i64: 32, 1024>}, {transform_indices = @transform_2, window_bounds = array<i64: 32, 1024>}]} {
    %c0 = arith.constant 0 : index
    %c0_0 = arith.constant 0 : index
    %0 = vector.load %arg2[%c0, %c0_0] : memref<32x1024xf32, #tpu.memory_space<vmem>>, vector<32x1024xf32>
    %c0_1 = arith.constant 0 : index
    %1 = memref.load %arg1[%c0_1] : memref<2xf32, #tpu.memory_space<smem>>
    %2 = vector.broadcast %1 : f32 to vector<32x1024xf32>
    %3 = arith.mulf %0, %2 : vector<32x1024xf32>
    %c1 = arith.constant 1 : index
    %4 = memref.load %arg1[%c1] : memref<2xf32, #tpu.memory_space<smem>>
    %5 = vector.broadcast %4 : f32 to vector<32x1024xf32>
    %6 = arith.addf %3, %5 : vector<32x1024xf32>
    %c0_2 = arith.constant 0 : index
    %c0_3 = arith.constant 0 : index
    %7 = vector.load %arg3[%c0_2, %c0_3] : memref<32x1024xf32, #tpu.memory_space<vmem>>, vector<32x1024xf32>
    tpu.vector_store %arg3[%c0_2, %c0_3], %6 {strides = array<i32>} : memref<32x1024xf32, #tpu.memory_space<vmem>>, vector<32x1024xf32>,
    return
  }
  func.func @transform_0(%arg0: i32) -> i32 {
    %c0_i32 = arith.constant 0 : i32
    %c0_i32_0 = arith.constant 0 : i32
    return %c0_i32 : i32
  }
  func.func @transform_1(%arg0: i32) -> (i32, i32) {
    %c0_i32 = arith.constant 0 : i32
    %c0_i32_0 = arith.constant 0 : i32
    return %arg0, %c0_i32 : i32, i32
  }
  func.func @transform_2(%arg0: i32) -> (i32, i32) {
    %c0_i32 = arith.constant 0 : i32
    %c0_i32_0 = arith.constant 0 : i32
    return %arg0, %c0_i32 : i32, i32
  }
}

</mosaic_0001>

<llo_original>
// kernel: tpu_custom_call.1
$region0: #{tpu_custom_call.1}
  #allocation0 [shape = 'u32[]', space=smem, size = 0x4, offset = 0x4, fixed_abs, tag = 'smem constant byte address 0x4 - core index']
  #allocation1 [shape = 'u32[144,128]{1,0:T(1,128)}', space=vmem, size = 0x12000, scoped, tag = 'internal scratch']
  %s0 = inlined_call_operand.hbm [shape: f32[2], index: 0, kind: input, shape index: {}]
  %s1 = inlined_call_operand.hbm [shape: f32[128,1024], index: 1, kind: input, shape index: {}]
  %s2 = inlined_call_operand.hbm [shape: f32[128,1024], index: 2, kind: output, shape index: {}]
  %s3 = sld [smem:[#allocation0]]
  $region49: #{tpu_custom_call.1} parent=0
    _
  %s5 = ssub.s32 1, %s3
  %s6 = scalar_select 0, %s5, %s3
  $region1: #{tpu_custom_call.1} parent=0
    #allocation2 [shape = 'u8[512]{0}', space=smem, size = 0x200, scoped, tag = 'input window, operand 0, single buffered']
    #allocation3 [shape = 's32[2]{0}', space=sflag, size = 0x8, scoped, tag = 'scoped memory for tpu_custom_call.1']
    #allocation4 [shape = 's32[2]{0}', space=sflag, size = 0x8, scoped, tag = 'scoped memory for tpu_custom_call.1']
    #allocation5 [shape = 's32[2]{0}', space=sflag, size = 0x8, scoped, tag = 'scoped memory for tpu_custom_call.1']
    #allocation6 [shape = 'u8[262144]{0}', space=vmem, size = 0x40000, scoped, tag = 'input window, operand 1']
    #allocation7 [shape = 'u8[262144]{0}', space=vmem, size = 0x40000, scoped, tag = 'output window, operand 0']
    %7 = vsyncpa [#allocation5], 0
    %8 = vsyncpa [#allocation3], 0
    %s9 = scalar_lea.sflag [#allocation3], 1
    %10 = vsyncpa %s9, 0
    %11 = vsyncpa [#allocation4], 0
    %s12 = scalar_lea.sflag [#allocation4], 1
    %13 = vsyncpa %s12, 0
    loop: start=0, step=1, limit=6
    $region2: #{tpu_custom_call.1} parent=1 // loop_pre_header
      _
    $region3: #{tpu_custom_call.1} parent=1 // loop_header
      %s15 = sphi 0, %s19
      %p16 = scmp.ge.s32.totalorder %s15, 6
      %s23 = sphi 0, %s23
      %s25 = sphi 0, %s23
      %s26 = sphi 0, %s25
      %s40 = sphi 0, %s26
      %s46 = sphi 0, %s48
      %s49 = sphi 0, %s46
      %s50 = sphi 0, %s49
      %s66 = sphi 0, %s50
      %s72 = sphi 0, %s74
      %s75 = sphi 0, %s72
      %s76 = sphi 0, %s75
      %s92 = sphi 0, %s76
    $region4: #{tpu_custom_call.1} parent=1 // loop_header_branch
      %18 = sbr.rel (%p16) target = $region8
    $region5: #{tpu_custom_call.1} parent=1 // loop_body
      %s20 = ssub.s32 %s15, 1
      %s21 = ssub.s32 %s15, 2
      %s22 = sadd.s32 %s15, 1
      %s24 = sadd.s32 %s23, 1
      %p27 = scmp.eq.s32.totalorder %s15, 3
      %p28 = scmp.ne.s32.totalorder %s23, %s25
      %p29 = scmp.eq.s32.totalorder %s15, 0
      %p30 = por %p28, %p29
      %p31 = scmp.ne.s32.totalorder %s23, %s25
      %p32 = scmp.eq.s32.totalorder %s20, 3
      %p33 = por %p31, %p32
      %p34 = scmp.ne.s32.totalorder %s25, %s26
      %p35 = scmp.eq.s32.totalorder %s20, 0
      %p36 = por %p34, %p35
      %p37 = scmp.ne.s32.totalorder %s25, %s26
      %p38 = scmp.eq.s32.totalorder %s21, 3
      %p39 = por %p37, %p38
      %p41 = scmp.ne.s32.totalorder %s26, %s40
      %p42 = scmp.eq.s32.totalorder %s21, 0
      %p43 = por %p41, %p42
      %s44 = ssub.s32 %s15, %s22
      %p45 = scmp.eq.s32.totalorder %s44, 0
      %s47 = sadd.s32 %s46, 1
      %s48 = scalar_select %p45, %s46, %s47
      %p51 = pneg %p45
      %p52 = scmp.eq.s32.totalorder %s15, 3
      %p53 = por %p51, %p52
      %p54 = scmp.ne.s32.totalorder %s46, %s49
      %p55 = scmp.eq.s32.totalorder %s15, 0
      %p56 = por %p54, %p55
      %p57 = scmp.ne.s32.totalorder %s46, %s49
      %p58 = scmp.eq.s32.totalorder %s20, 3
      %p59 = por %p57, %p58
      %p60 = scmp.ne.s32.totalorder %s49, %s50
      %p61 = scmp.eq.s32.totalorder %s20, 0
      %p62 = por %p60, %p61
      %p63 = scmp.ne.s32.totalorder %s49, %s50
      %p64 = scmp.eq.s32.totalorder %s21, 3
      %p65 = por %p63, %p64
      %p67 = scmp.ne.s32.totalorder %s50, %s66
      %p68 = scmp.eq.s32.totalorder %s21, 0
      %p69 = por %p67, %p68
      %s70 = ssub.s32 %s15, %s22
      %p71 = scmp.eq.s32.totalorder %s70, 0
      %s73 = sadd.s32 %s72, 1
      %s74 = scalar_select %p71, %s72, %s73
      %p77 = pneg %p71
      %p78 = scmp.eq.s32.totalorder %s15, 3
      %p79 = por %p77, %p78
      %p80 = scmp.ne.s32.totalorder %s72, %s75
      %p81 = scmp.eq.s32.totalorder %s15, 0
      %p82 = por %p80, %p81
      %p83 = scmp.ne.s32.totalorder %s72, %s75
      %p84 = scmp.eq.s32.totalorder %s20, 3
      %p85 = por %p83, %p84
      %p86 = scmp.ne.s32.totalorder %s75, %s76
      %p87 = scmp.eq.s32.totalorder %s20, 0
      %p88 = por %p86, %p87
      %p89 = scmp.ne.s32.totalorder %s75, %s76
      %p90 = scmp.eq.s32.totalorder %s21, 3
      %p91 = por %p89, %p90
      %p93 = scmp.ne.s32.totalorder %s76, %s92
      %p94 = scmp.eq.s32.totalorder %s21, 0
      %p95 = por %p93, %p94
      %p96 = scmp.le.s32.totalorder 1, %s15
      %p97 = scmp.lt.s32.totalorder %s15, 5
      %p98 = pnand %p96, %p97
      %p99 = pneg %p98
      // Predicated region
      $region9: #{tpu_custom_call.1} parent=5 // pred_check
        _
      $region10: #{tpu_custom_call.1} parent=5 // pred_check_branch
        %101 = sbr.rel (%p98) target = $region12
      $region11: #{tpu_custom_call.1} parent=5 // pred_region
        %s102 = ssub.s32 %s15, 1
        // Predicated region
        $region13: #{tpu_custom_call.1} parent=11 // pred_check
          %p103 = pneg %p36
        $region14: #{tpu_custom_call.1} parent=11 // pred_check_branch
          %105 = sbr.rel (%p103) target = $region16
        $region15: #{tpu_custom_call.1} parent=11 // pred_region
          %s107 = ssub.s32 16, 16
          %108 = vsyncadd [#allocation5], %s107
          %111 = dma.hbm_to_smem %s0, 16, [#allocation2], [#allocation5]
        $region16: #{tpu_custom_call.1} parent=11 // pred_fallthru
          _
      $region12: #{tpu_custom_call.1} parent=5 // pred_fallthru
        _
      %p112 = scmp.lt.s32.totalorder %s15, 4
      // Predicated region
      $region17: #{tpu_custom_call.1} parent=5 // pred_check
        %p113 = pneg %p112
      $region18: #{tpu_custom_call.1} parent=5 // pred_check_branch
        %115 = sbr.rel (%p113) target = $region20
      $region19: #{tpu_custom_call.1} parent=5 // pred_region
        // Predicated region
        $region21: #{tpu_custom_call.1} parent=19 // pred_check
          %p116 = pneg %p56
        $region22: #{tpu_custom_call.1} parent=19 // pred_check_branch
          %118 = sbr.rel (%p116) target = $region24
        $region23: #{tpu_custom_call.1} parent=19 // pred_region
          %s119 = sand.u32 %s46, 1
          %s120 = scalar_lea.sflag [#allocation3], %s119
          %s121 = sand.u32 %s46, 1
          %s122 = smul.addr %s121, 256
          %s123 = scalar_lea.vmem [#allocation6], %s122
          %s124 = smul.u32 4, %s15
          %s126 = ssub.s32 4096, 4096
          %127 = vsyncadd %s120, %s126
          %s128 = smul.addr %s124, 8
          %s129 = smul.addr %s128, 128
          %s130 = scalar_lea.hbm %s1, %s129
          %s131 = sshll.u32 %s123, 4
          %s132 = int_to_ptr.vmem [resolvable:$true] %s131
          %137 = dma.hbm_to_vmem [thread:$0]  %s130, 4096, %s132, %s120, 1024, 1024, 64
        $region24: #{tpu_custom_call.1} parent=19 // pred_fallthru
          _
      $region20: #{tpu_custom_call.1} parent=5 // pred_fallthru
        _
      %p138 = scmp.le.s32.totalorder 1, %s15
      %p139 = scmp.lt.s32.totalorder %s15, 5
      %p140 = pnand %p138, %p139
      %p141 = pneg %p140
      // Predicated region
      $region25: #{tpu_custom_call.1} parent=5 // pred_check
        _
      $region26: #{tpu_custom_call.1} parent=5 // pred_check_branch
        %143 = sbr.rel (%p140) target = $region28
      $region27: #{tpu_custom_call.1} parent=5 // pred_region
        %s144 = ssub.s32 %s15, 1
        // Predicated region
        $region29: #{tpu_custom_call.1} parent=27 // pred_check
          %p145 = pneg %p36
        $region30: #{tpu_custom_call.1} parent=27 // pred_check_branch
          %147 = sbr.rel (%p145) target = $region32
        $region31: #{tpu_custom_call.1} parent=27 // pred_region
          %148 = dma.done [#allocation5], 16
        $region32: #{tpu_custom_call.1} parent=27 // pred_fallthru
          _
        %s149 = sand.u32 %s49, 1
        %s150 = scalar_lea.sflag [#allocation3], %s149
        %s151 = sand.u32 %s49, 1
        %s152 = smul.addr %s151, 256
        %s153 = scalar_lea.vmem [#allocation6], %s152
        // Predicated region
        $region33: #{tpu_custom_call.1} parent=27 // pred_check
          %p154 = pneg %p62
        $region34: #{tpu_custom_call.1} parent=27 // pred_check_branch
          %156 = sbr.rel (%p154) target = $region36
        $region35: #{tpu_custom_call.1} parent=27 // pred_region
          %157 = dma.done %s150, 4096
        $region36: #{tpu_custom_call.1} parent=27 // pred_fallthru
          _
        %158 = sfence
        %p159 = pneg %p36
        %p160 = pneg %p33
        %s161 = sand.u32 %s49, 1
        %s162 = scalar_lea.sflag [#allocation3], %s161
        %s163 = sand.u32 %s49, 1
        %s164 = smul.addr %s163, 256
        %s165 = scalar_lea.vmem [#allocation6], %s164
        %p166 = pneg %p62
        %p167 = pneg %p59
        %p168 = pneg %p88
        %p169 = pneg %p85
        %s170 = sand.u32 %s75, 1
        %s171 = scalar_lea.sflag [#allocation4], %s170
        %s172 = sand.u32 %s75, 1
        %s173 = smul.addr %s172, 256
        %s174 = scalar_lea.vmem [#allocation7], %s173
        %s175 = smul.u32 4, %s20
        %s176 = smul.u32 4, %s20
        %v177 = vld [vmem:[%s153] sm:$0xff]
        %v178 = vld [vmem:[%s153 + $0x8] sm:$0xff]
        %v179 = vld [vmem:[%s153 + $0x10] sm:$0xff]
        %v180 = vld [vmem:[%s153 + $0x18] sm:$0xff]
        %v181 = vld [vmem:[%s153 + $0x20] sm:$0xff]
        %v182 = vld [vmem:[%s153 + $0x28] sm:$0xff]
        %v183 = vld [vmem:[%s153 + $0x30] sm:$0xff]
        %v184 = vld [vmem:[%s153 + $0x38] sm:$0xff]
        %v185 = vld [vmem:[%s153 + $0x40] sm:$0xff]
        %v186 = vld [vmem:[%s153 + $0x48] sm:$0xff]
        %v187 = vld [vmem:[%s153 + $0x50] sm:$0xff]
        %v188 = vld [vmem:[%s153 + $0x58] sm:$0xff]
        %v189 = vld [vmem:[%s153 + $0x60] sm:$0xff]
        %v190 = vld [vmem:[%s153 + $0x68] sm:$0xff]
        %v191 = vld [vmem:[%s153 + $0x70] sm:$0xff]
        %v192 = vld [vmem:[%s153 + $0x78] sm:$0xff]
        %v193 = vld [vmem:[%s153 + $0x80] sm:$0xff]
        %v194 = vld [vmem:[%s153 + $0x88] sm:$0xff]
        %v195 = vld [vmem:[%s153 + $0x90] sm:$0xff]
        %v196 = vld [vmem:[%s153 + $0x98] sm:$0xff]
        %v197 = vld [vmem:[%s153 + $0xa0] sm:$0xff]
        %v198 = vld [vmem:[%s153 + $0xa8] sm:$0xff]
        %v199 = vld [vmem:[%s153 + $0xb0] sm:$0xff]
        %v200 = vld [vmem:[%s153 + $0xb8] sm:$0xff]
        %v201 = vld [vmem:[%s153 + $0xc0] sm:$0xff]
        %v202 = vld [vmem:[%s153 + $0xc8] sm:$0xff]
        %v203 = vld [vmem:[%s153 + $0xd0] sm:$0xff]
        %v204 = vld [vmem:[%s153 + $0xd8] sm:$0xff]
        %v205 = vld [vmem:[%s153 + $0xe0] sm:$0xff]
        %v206 = vld [vmem:[%s153 + $0xe8] sm:$0xff]
        %v207 = vld [vmem:[%s153 + $0xf0] sm:$0xff]
        %v208 = vld [vmem:[%s153 + $0xf8] sm:$0xff]
        %s209 = sld [smem:[#allocation2]]
        %v210 = vstv %s209
        %v211 = vmul.f32 %v177, %v210
        %v212 = vmul.f32 %v178, %v210
        %v213 = vmul.f32 %v179, %v210
        %v214 = vmul.f32 %v180, %v210
        %v215 = vmul.f32 %v181, %v210
        %v216 = vmul.f32 %v182, %v210
        %v217 = vmul.f32 %v183, %v210
        %v218 = vmul.f32 %v184, %v210
        %v219 = vmul.f32 %v185, %v210
        %v220 = vmul.f32 %v186, %v210
        %v221 = vmul.f32 %v187, %v210
        %v222 = vmul.f32 %v188, %v210
        %v223 = vmul.f32 %v189, %v210
        %v224 = vmul.f32 %v190, %v210
        %v225 = vmul.f32 %v191, %v210
        %v226 = vmul.f32 %v192, %v210
        %v227 = vmul.f32 %v193, %v210
        %v228 = vmul.f32 %v194, %v210
        %v229 = vmul.f32 %v195, %v210
        %v230 = vmul.f32 %v196, %v210
        %v231 = vmul.f32 %v197, %v210
        %v232 = vmul.f32 %v198, %v210
        %v233 = vmul.f32 %v199, %v210
        %v234 = vmul.f32 %v200, %v210
        %v235 = vmul.f32 %v201, %v210
        %v236 = vmul.f32 %v202, %v210
        %v237 = vmul.f32 %v203, %v210
        %v238 = vmul.f32 %v204, %v210
        %v239 = vmul.f32 %v205, %v210
        %v240 = vmul.f32 %v206, %v210
        %v241 = vmul.f32 %v207, %v210
        %v242 = vmul.f32 %v208, %v210
        %s243 = sld [smem:[#allocation2 + $0x1]]
        %v244 = vstv %s243
        %v245 = vadd.f32 %v211, %v244
        %v246 = vadd.f32 %v212, %v244
        %v247 = vadd.f32 %v213, %v244
        %v248 = vadd.f32 %v214, %v244
        %v249 = vadd.f32 %v215, %v244
        %v250 = vadd.f32 %v216, %v244
        %v251 = vadd.f32 %v217, %v244
        %v252 = vadd.f32 %v218, %v244
        %v253 = vadd.f32 %v219, %v244
        %v254 = vadd.f32 %v220, %v244
        %v255 = vadd.f32 %v221, %v244
        %v256 = vadd.f32 %v222, %v244
        %v257 = vadd.f32 %v223, %v244
        %v258 = vadd.f32 %v224, %v244
        %v259 = vadd.f32 %v225, %v244
        %v260 = vadd.f32 %v226, %v244
        %v261 = vadd.f32 %v227, %v244
        %v262 = vadd.f32 %v228, %v244
        %v263 = vadd.f32 %v229, %v244
        %v264 = vadd.f32 %v230, %v244
        %v265 = vadd.f32 %v231, %v244
        %v266 = vadd.f32 %v232, %v244
        %v267 = vadd.f32 %v233, %v244
        %v268 = vadd.f32 %v234, %v244
        %v269 = vadd.f32 %v235, %v244
        %v270 = vadd.f32 %v236, %v244
        %v271 = vadd.f32 %v237, %v244
        %v272 = vadd.f32 %v238, %v244
        %v273 = vadd.f32 %v239, %v244
        %v274 = vadd.f32 %v240, %v244
        %v275 = vadd.f32 %v241, %v244
        %v276 = vadd.f32 %v242, %v244
        %277 = vst [vmem:[%s174] sm:$0xff] %v245
        %278 = vst [vmem:[%s174 + $0x8] sm:$0xff] %v246
        %279 = vst [vmem:[%s174 + $0x10] sm:$0xff] %v247
        %280 = vst [vmem:[%s174 + $0x18] sm:$0xff] %v248
        %281 = vst [vmem:[%s174 + $0x20] sm:$0xff] %v249
        %282 = vst [vmem:[%s174 + $0x28] sm:$0xff] %v250
        %283 = vst [vmem:[%s174 + $0x30] sm:$0xff] %v251
        %284 = vst [vmem:[%s174 + $0x38] sm:$0xff] %v252
        %285 = vst [vmem:[%s174 + $0x40] sm:$0xff] %v253
        %286 = vst [vmem:[%s174 + $0x48] sm:$0xff] %v254
        %287 = vst [vmem:[%s174 + $0x50] sm:$0xff] %v255
        %288 = vst [vmem:[%s174 + $0x58] sm:$0xff] %v256
        %289 = vst [vmem:[%s174 + $0x60] sm:$0xff] %v257
        %290 = vst [vmem:[%s174 + $0x68] sm:$0xff] %v258
        %291 = vst [vmem:[%s174 + $0x70] sm:$0xff] %v259
        %292 = vst [vmem:[%s174 + $0x78] sm:$0xff] %v260
        %293 = vst [vmem:[%s174 + $0x80] sm:$0xff] %v261
        %294 = vst [vmem:[%s174 + $0x88] sm:$0xff] %v262
        %295 = vst [vmem:[%s174 + $0x90] sm:$0xff] %v263
        %296 = vst [vmem:[%s174 + $0x98] sm:$0xff] %v264
        %297 = vst [vmem:[%s174 + $0xa0] sm:$0xff] %v265
        %298 = vst [vmem:[%s174 + $0xa8] sm:$0xff] %v266
        %299 = vst [vmem:[%s174 + $0xb0] sm:$0xff] %v267
        %300 = vst [vmem:[%s174 + $0xb8] sm:$0xff] %v268
        %301 = vst [vmem:[%s174 + $0xc0] sm:$0xff] %v269
        %302 = vst [vmem:[%s174 + $0xc8] sm:$0xff] %v270
        %303 = vst [vmem:[%s174 + $0xd0] sm:$0xff] %v271
        %304 = vst [vmem:[%s174 + $0xd8] sm:$0xff] %v272
        %305 = vst [vmem:[%s174 + $0xe0] sm:$0xff] %v273
        %306 = vst [vmem:[%s174 + $0xe8] sm:$0xff] %v274
        %307 = vst [vmem:[%s174 + $0xf0] sm:$0xff] %v275
        %308 = vst [vmem:[%s174 + $0xf8] sm:$0xff] %v276
        %s309 = sand.u32 %s75, 1
        %s310 = scalar_lea.sflag [#allocation4], %s309
        %s311 = sand.u32 %s75, 1
        %s312 = smul.addr %s311, 256
        %s313 = scalar_lea.vmem [#allocation7], %s312
        // Predicated region
        $region37: #{tpu_custom_call.1} parent=27 // pred_check
          %p314 = pneg %p85
        $region38: #{tpu_custom_call.1} parent=27 // pred_check_branch
          %316 = sbr.rel (%p314) target = $region40
        $region39: #{tpu_custom_call.1} parent=27 // pred_region
          %s317 = smul.u32 4, %s20
          %s319 = ssub.s32 4096, 4096
          %320 = vsyncadd %s310, %s319
          %s321 = smul.addr %s317, 8
          %s322 = smul.addr %s321, 128
          %s323 = scalar_lea.hbm %s2, %s322
          %s324 = sshll.u32 %s313, 4
          %s325 = int_to_ptr.vmem [resolvable:$true] %s324
          %330 = dma.vmem_to_hbm [thread:$0]  %s325, 4096, %s323, %s310, 1024, 1024, 64
        $region40: #{tpu_custom_call.1} parent=27 // pred_fallthru
          _
      $region28: #{tpu_custom_call.1} parent=5 // pred_fallthru
        _
      %p331 = scmp.le.s32.totalorder 2, %s15
      // Predicated region
      $region41: #{tpu_custom_call.1} parent=5 // pred_check
        %p332 = pneg %p331
      $region42: #{tpu_custom_call.1} parent=5 // pred_check_branch
        %334 = sbr.rel (%p332) target = $region44
      $region43: #{tpu_custom_call.1} parent=5 // pred_region
        %s335 = ssub.s32 %s15, 2
        // Predicated region
        $region45: #{tpu_custom_call.1} parent=43 // pred_check
          %p336 = pneg %p91
        $region46: #{tpu_custom_call.1} parent=43 // pred_check_branch
          %338 = sbr.rel (%p336) target = $region48
        $region47: #{tpu_custom_call.1} parent=43 // pred_region
          %s339 = sand.u32 %s76, 1
          %s340 = scalar_lea.sflag [#allocation4], %s339
          %s341 = sand.u32 %s76, 1
          %s342 = smul.addr %s341, 256
          %s343 = scalar_lea.vmem [#allocation7], %s342
          %344 = dma.done %s340, 4096
        $region48: #{tpu_custom_call.1} parent=43 // pred_fallthru
          _
      $region44: #{tpu_custom_call.1} parent=5 // pred_fallthru
        _
    $region6: #{tpu_custom_call.1} parent=1 // loop_footer
      %s19 = sadd.s32 1, %s15
    $region7: #{tpu_custom_call.1} parent=1 // loop_footer_branch
      %14 = sbr.rel target = $region3
    $region8: #{tpu_custom_call.1} parent=1 // loop_exit
      _
    %345 = vsyncpa [#allocation3], 1
    %s346 = scalar_lea.sflag [#allocation3], 1
    %347 = vsyncpa %s346, 1
    %348 = vsyncpa [#allocation4], 1
    %s349 = scalar_lea.sflag [#allocation4], 1
    %350 = vsyncpa %s349, 1
    %351 = vsyncpa [#allocation5], 1
    %s352 = scalar_lea.sflag [#allocation5], 1
    %353 = vsyncpa %s352, 1

</llo_original>
